<compile_context>
chip_gen: v7x
topology: tpu7x:2x2x1
jax: 0.10.0
libtpu: 0.0.40
codegen_flags: <defaults>
</compile_context>

<pallas_src>
import functools

import jax
import jax.numpy as jnp
from jax import lax
from jax.experimental import pallas as pl
from jax.experimental.pallas import tpu as pltpu

_LANES = 128
_MAX_BLOCK_ROWS = 2048  # 2048*128 elems/input/block (~1 MiB f32); ~12 MiB peak VMEM


def _make_kernel(*, beta: float, label_smoothing: float, ipo: bool,
                 drdpo_beta: float, true_b: int, block_rows: int,
                 needs_mask: bool):
    inv_drdpo = 1.0 / drdpo_beta

    def kernel(pc_ref, pr_ref, rc_ref, rr_ref, partials_ref, rewards_ref):
        # Upcast after the (native-dtype) DMA load.
        pc = pc_ref[...].astype(jnp.float32)
        pr = pr_ref[...].astype(jnp.float32)
        rc = rc_ref[...].astype(jnp.float32)
        rr = rr_ref[...].astype(jnp.float32)

        logits = (pc - pr) - (rc - rr)
        if ipo:
            losses = (logits - 1.0 / (2.0 * beta)) ** 2
        else:
            # -logsig(x)*(1-s) - logsig(-x)*s  ==  -logsig(x) + s*x
            x = beta * logits
            logsig = jnp.minimum(x, 0.0) - jnp.log1p(jnp.exp(-jnp.abs(x)))
            losses = -logsig
            if label_smoothing != 0.0:
                losses = losses + label_smoothing * x

        z = -losses * inv_drdpo

        if needs_mask:
            # Mask lane padding and (for the ragged last block) OOB garbage
            # out of the log-mean-exp.  Scalar threshold keeps this to a few
            # VPU ops per element.  int32 is plenty (overflow only ~B>2^31).
            i = pl.program_id(0)
            r_ids = lax.broadcasted_iota(jnp.int32, (block_rows, _LANES), 0)
            l_ids = lax.broadcasted_iota(jnp.int32, (block_rows, _LANES), 1)
            local = r_ids * _LANES + l_ids
            thresh = true_b - i * (block_rows * _LANES)
            z = jnp.where(local < thresh, z, -jnp.inf)

        # Per-block log-sum-exp partials (combined in the wrapper): no
        # cross-step state, so the grid axis is safely "parallel".
        m_blk = jnp.max(z)
        partials_ref[0, 0] = m_blk
        partials_ref[0, 1] = jnp.sum(jnp.exp(z - m_blk))

        # Fused reward slab: row 0 = chosen, row 1 = rejected (one writeback).
        rewards_ref[0, :, :] = (beta * (pc - rc)).astype(rewards_ref.dtype)
        rewards_ref[1, :, :] = (beta * (pr - rr)).astype(rewards_ref.dtype)

    return kernel


@functools.partial(jax.jit, static_argnames=("beta", "label_smoothing",
                                             "ipo", "drdpo_beta"))
def drdpo_loss(policy_chosen_logps, policy_rejected_logps,
               reference_chosen_logps, reference_rejected_logps,
               *, beta: float = 0.1, label_smoothing: float = 0.0,
               ipo: bool = False, drdpo_beta: float = 1.0):
    B = policy_chosen_logps.shape[0]
    out_dtype = policy_chosen_logps.dtype

    rows = max(1, (B + _LANES - 1) // _LANES)     # rows actually needed
    padded = rows * _LANES                        # lane-padded length only
    block_rows = min(rows, _MAX_BLOCK_ROWS)
    num_blocks = (rows + block_rows - 1) // block_rows   # ragged last block OK
    needs_mask = (padded != B) or (rows != block_rows * num_blocks)

    def to_tiles(x):
        # Keep native dtype; pad only to a multiple of 128 lanes (reshape is
        # free when B % 128 == 0 -- no full-block rounding copy).
        if padded != B:
            x = jnp.pad(x, (0, padded - B))
        return x.reshape(rows, _LANES)

    kernel = _make_kernel(beta=beta, label_smoothing=label_smoothing, ipo=ipo,
                          drdpo_beta=drdpo_beta, true_b=B,
                          block_rows=block_rows, needs_mask=needs_mask)

    in_spec = pl.BlockSpec((block_rows, _LANES), lambda i: (i, 0))

    partials, rewards = pl.pallas_call(
        kernel,
        out_shape=(
            jax.ShapeDtypeStruct((num_blocks, 2), jnp.float32),
            jax.ShapeDtypeStruct((2, rows, _LANES), out_dtype),
        ),
        grid_spec=pltpu.PrefetchScalarGridSpec(
            num_scalar_prefetch=0,
            grid=(num_blocks,),
            in_specs=[in_spec, in_spec, in_spec, in_spec],
            out_specs=(
                pl.BlockSpec((1, 2), lambda i: (i, 0),
                             memory_space=pltpu.MemorySpace.SMEM),
                pl.BlockSpec((2, block_rows, _LANES), lambda i: (0, i, 0)),
            ),
        ),
        compiler_params=pltpu.CompilerParams(
            dimension_semantics=("parallel",),   # megacore-shardable on v7x
            vmem_limit_bytes=32 << 20),
    )(to_tiles(policy_chosen_logps), to_tiles(policy_rejected_logps),
      to_tiles(reference_chosen_logps), to_tiles(reference_rejected_logps))

    # Combine the per-block (m, s) log-sum-exp partials (tiny, wrapper-side).
    m = partials[:, 0]
    s = partials[:, 1]
    m_max = jnp.max(m)
    s_tot = jnp.sum(s * jnp.exp(m - m_max))
    # loss = -b * log(mean(exp(-losses / b)))
    loss = -drdpo_beta * (m_max + jnp.log(s_tot) - jnp.log(jnp.float32(B)))

    rew = rewards.reshape(2, padded)
    if padded != B:
        rew = rew[:, :B]   # single slice, only when padding exists
    return loss, rew[0], rew[1]


def _reference(pc, pr, rc, rr, beta, label_smoothing, ipo, drdpo_beta):
    pc, pr, rc, rr = (v.astype(jnp.float32) for v in (pc, pr, rc, rr))
    logits = (pc - pr) - (rc - rr)
    if ipo:
        losses = (logits - 1.0 / (2.0 * beta)) ** 2
    else:
        losses = (-jax.nn.log_sigmoid(beta * logits) * (1.0 - label_smoothing)
                  - jax.nn.log_sigmoid(-beta * logits) * label_smoothing)
    loss = -drdpo_beta * jnp.log(jnp.mean(jnp.exp(-losses / drdpo_beta)))
    return loss, beta * (pc - rc), beta * (pr - rr)


if __name__ == "__main__":
    key = jax.random.PRNGKey(0)

    def run_case(B, beta, label_smoothing, ipo, drdpo_beta, subkey):
        k1, k2, k3, k4 = jax.random.split(subkey, 4)
        pc = -jnp.abs(jax.random.normal(k1, (B,), jnp.float32)) * 5.0
        pr = -jnp.abs(jax.random.normal(k2, (B,), jnp.float32)) * 5.0
        rc = -jnp.abs(jax.random.normal(k3, (B,), jnp.float32)) * 5.0
        rr = -jnp.abs(jax.random.normal(k4, (B,), jnp.float32)) * 5.0

        out = drdpo_loss(pc, pr, rc, rr, beta=beta,
                         label_smoothing=label_smoothing, ipo=ipo,
                         drdpo_beta=drdpo_beta)
        jax.block_until_ready(out)
        loss, cr, rr_out = out

        ref_loss, ref_cr, ref_rr = _reference(pc, pr, rc, rr, beta,
                                              label_smoothing, ipo, drdpo_beta)
        assert jnp.allclose(loss, ref_loss, atol=1e-5, rtol=1e-5)
        assert jnp.allclose(cr, ref_cr, atol=1e-5, rtol=1e-5)
        assert jnp.allclose(rr_out, ref_rr, atol=1e-5, rtol=1e-5)

    ka, kb, kc = jax.random.split(key, 3)
    # Small batch, DPO (sigmoid) path with label smoothing; lane padding used.
    run_case(B=8, beta=0.1, label_smoothing=0.1, ipo=False, drdpo_beta=1.0,
             subkey=ka)
    # Non-multiple-of-128 batch, IPO path, different DR-DPO beta.
    run_case(B=200, beta=0.05, label_smoothing=0.0, ipo=True, drdpo_beta=0.5,
             subkey=kb)
    # Lane-aligned batch: exercises the no-mask / no-pad / no-slice fast path.
    run_case(B=256, beta=0.1, label_smoothing=0.0, ipo=False, drdpo_beta=2.0,
             subkey=kc)

    print("KERNEL_OK")
</pallas_src>

<mosaic_0001>
module attributes {stable_mosaic.version = 11 : i64} {
  func.func @kernel(%arg0: i32, %arg1: memref<1x128xf32, #tpu.memory_space<vmem>>, %arg2: memref<1x128xf32, #tpu.memory_space<vmem>>, %arg3: memref<1x128xf32, #tpu.memory_space<vmem>>, %arg4: memref<1x128xf32, #tpu.memory_space<vmem>>, %arg5: memref<1x2xf32, #tpu.memory_space<smem>>, %arg6: memref<2x1x128xf32, #tpu.memory_space<vmem>>) attributes {dimension_semantics = [#tpu.dimension_semantics<parallel>], iteration_bounds = array<i64: 1>, scalar_prefetch = 0 : i64, scratch_operands = 0 : i64, tpu.core_type = #tpu.core_type<tc>, window_params = [{transform_indices = @transform_0, window_bounds = array<i64: 1, 128>}, {transform_indices = @transform_1, window_bounds = array<i64: 1, 128>}, {transform_indices = @transform_2, window_bounds = array<i64: 1, 128>}, {transform_indices = @transform_3, window_bounds = array<i64: 1, 128>}, {transform_indices = @transform_4, window_bounds = array<i64: 1, 2>}, {transform_indices = @transform_5, window_bounds = array<i64: 2, 1, 128>}]} {
    %c0 = arith.constant 0 : index
    %c0_0 = arith.constant 0 : index
    %0 = vector.load %arg1[%c0, %c0_0] : memref<1x128xf32, #tpu.memory_space<vmem>>, vector<1x128xf32>
    %c0_1 = arith.constant 0 : index
    %c0_2 = arith.constant 0 : index
    %1 = vector.load %arg2[%c0_1, %c0_2] : memref<1x128xf32, #tpu.memory_space<vmem>>, vector<1x128xf32>
    %c0_3 = arith.constant 0 : index
    %c0_4 = arith.constant 0 : index
    %2 = vector.load %arg3[%c0_3, %c0_4] : memref<1x128xf32, #tpu.memory_space<vmem>>, vector<1x128xf32>
    %c0_5 = arith.constant 0 : index
    %c0_6 = arith.constant 0 : index
    %3 = vector.load %arg4[%c0_5, %c0_6] : memref<1x128xf32, #tpu.memory_space<vmem>>, vector<1x128xf32>
    %4 = arith.subf %0, %1 : vector<1x128xf32>
    %5 = arith.subf %2, %3 : vector<1x128xf32>
    %6 = arith.subf %4, %5 : vector<1x128xf32>
    %cst = arith.constant 1.000000e-01 : f32
    %7 = vector.broadcast %cst : f32 to vector<1x128xf32>
    %8 = arith.mulf %7, %6 : vector<1x128xf32>
    %cst_7 = arith.constant 0.000000e+00 : f32
    %9 = vector.broadcast %cst_7 : f32 to vector<1x128xf32>
    %10 = arith.minimumf %8, %9 : vector<1x128xf32>
    %11 = math.absf %8 : vector<1x128xf32>
    %cst_8 = arith.constant 0.000000e+00 : f32
    %12 = vector.broadcast %cst_8 : f32 to vector<1x128xf32>
    %13 = arith.subf %12, %11 : vector<1x128xf32>
    %14 = math.exp %13 : vector<1x128xf32>
    %15 = math.log1p %14 : vector<1x128xf32>
    %16 = arith.subf %10, %15 : vector<1x128xf32>
    %cst_9 = arith.constant 0.000000e+00 : f32
    %17 = vector.broadcast %cst_9 : f32 to vector<1x128xf32>
    %18 = arith.subf %17, %16 : vector<1x128xf32>
    %cst_10 = arith.constant 1.000000e-01 : f32
    %19 = vector.broadcast %cst_10 : f32 to vector<1x128xf32>
    %20 = arith.mulf %19, %8 : vector<1x128xf32>
    %21 = arith.addf %18, %20 : vector<1x128xf32>
    %cst_11 = arith.constant 0.000000e+00 : f32
    %22 = vector.broadcast %cst_11 : f32 to vector<1x128xf32>
    %23 = arith.subf %22, %21 : vector<1x128xf32>
    %cst_12 = arith.constant 1.000000e+00 : f32
    %24 = vector.broadcast %cst_12 : f32 to vector<1x128xf32>
    %25 = arith.mulf %23, %24 : vector<1x128xf32>
    %26 = tpu.iota {dimensions = array<i32: 0>} : vector<1x128xi32>
    %27 = tpu.iota {dimensions = array<i32: 1>} : vector<1x128xi32>
    %c128_i32 = arith.constant 128 : i32
    %28 = vector.broadcast %c128_i32 : i32 to vector<1x128xi32>
    %29 = arith.muli %26, %28 : vector<1x128xi32>
    %30 = arith.addi %29, %27 : vector<1x128xi32>
    %c128_i32_13 = arith.constant 128 : i32
    %31 = arith.muli %arg0, %c128_i32_13 : i32
    %c8_i32 = arith.constant 8 : i32
    %32 = arith.subi %c8_i32, %31 : i32
    %33 = vector.broadcast %32 : i32 to vector<1x128xi32>
    %34 = arith.cmpi slt, %30, %33 : vector<1x128xi32>
    %cst_14 = arith.constant 0xFF800000 : f32
    %35 = vector.broadcast %cst_14 : f32 to vector<1x128xf32>
    %36 = arith.select %34, %25, %35 : vector<1x128xi1>, vector<1x128xf32>
    %37 = vector.shape_cast %36 : vector<1x128xf32> to vector<1x1x128xf32>
    %cst_15 = arith.constant dense<0xFF800000> : vector<1xf32>
    %38 = vector.multi_reduction <maximumf>, %37, %cst_15 [1, 2] : vector<1x1x128xf32> to vector<1xf32>
    %39 = vector.shape_cast %38 : vector<1xf32> to vector<1x1x1xf32>
    %40 = vector.extract %39[0, 0, 0] : f32 from vector<1x1x1xf32>
    %c0_16 = arith.constant 0 : index
    %c0_17 = arith.constant 0 : index
    %41 = memref.load %arg5[%c0_16, %c0_17] : memref<1x2xf32, #tpu.memory_space<smem>>
    memref.store %40, %arg5[%c0_16, %c0_17] : memref<1x2xf32, #tpu.memory_space<smem>>
    %42 = vector.broadcast %40 : f32 to vector<1x128xf32>
    %43 = arith.subf %36, %42 : vector<1x128xf32>
    %44 = math.exp %43 : vector<1x128xf32>
    %45 = vector.shape_cast %44 : vector<1x128xf32> to vector<1x1x128xf32>
    %cst_18 = arith.constant dense<0.000000e+00> : vector<1xf32>
    %46 = vector.multi_reduction <add>, %45, %cst_18 [1, 2] : vector<1x1x128xf32> to vector<1xf32>
    %47 = vector.shape_cast %46 : vector<1xf32> to vector<1x1x1xf32>
    %48 = vector.extract %47[0, 0, 0] : f32 from vector<1x1x1xf32>
    %c0_19 = arith.constant 0 : index
    %c1 = arith.constant 1 : index
    %49 = memref.load %arg5[%c0_19, %c1] : memref<1x2xf32, #tpu.memory_space<smem>>
    memref.store %48, %arg5[%c0_19, %c1] : memref<1x2xf32, #tpu.memory_space<smem>>
    %50 = arith.subf %0, %2 : vector<1x128xf32>
    %cst_20 = arith.constant 1.000000e-01 : f32
    %51 = vector.broadcast %cst_20 : f32 to vector<1x128xf32>
    %52 = arith.mulf %51, %50 : vector<1x128xf32>
    %c0_21 = arith.constant 0 : index
    %c0_22 = arith.constant 0 : index
    %c0_23 = arith.constant 0 : index
    %53 = vector.load %arg6[%c0_21, %c0_22, %c0_23] : memref<2x1x128xf32, #tpu.memory_space<vmem>>, vector<1x1x128xf32>
    %54 = vector.shape_cast %53 : vector<1x1x128xf32> to vector<1x128xf32>
    %55 = vector.shape_cast %52 : vector<1x128xf32> to vector<1x1x128xf32>
    tpu.vector_store %arg6[%c0_21, %c0_22, %c0_23], %55 {strides = array<i32>} : memref<2x1x128xf32, #tpu.memory_space<vmem>>, vector<1x1x128xf32>,
    %56 = arith.subf %1, %3 : vector<1x128xf32>
    %cst_24 = arith.constant 1.000000e-01 : f32
    %57 = vector.broadcast %cst_24 : f32 to vector<1x128xf32>
    %58 = arith.mulf %57, %56 : vector<1x128xf32>
    %c1_25 = arith.constant 1 : index
    %c0_26 = arith.constant 0 : index
    %c0_27 = arith.constant 0 : index
    %59 = vector.load %arg6[%c1_25, %c0_26, %c0_27] : memref<2x1x128xf32, #tpu.memory_space<vmem>>, vector<1x1x128xf32>
    %60 = vector.shape_cast %59 : vector<1x1x128xf32> to vector<1x128xf32>
    %61 = vector.shape_cast %58 : vector<1x128xf32> to vector<1x1x128xf32>
    tpu.vector_store %arg6[%c1_25, %c0_26, %c0_27], %61 {strides = array<i32>} : memref<2x1x128xf32, #tpu.memory_space<vmem>>, vector<1x1x128xf32>,
    return
  }
  func.func @transform_0(%arg0: i32) -> (i32, i32) {
    %c0_i32 = arith.constant 0 : i32
    %c0_i32_0 = arith.constant 0 : i32
    return %arg0, %c0_i32 : i32, i32
  }
  func.func @transform_1(%arg0: i32) -> (i32, i32) {
    %c0_i32 = arith.constant 0 : i32
    %c0_i32_0 = arith.constant 0 : i32
    return %arg0, %c0_i32 : i32, i32
  }
  func.func @transform_2(%arg0: i32) -> (i32, i32) {
    %c0_i32 = arith.constant 0 : i32
    %c0_i32_0 = arith.constant 0 : i32
    return %arg0, %c0_i32 : i32, i32
  }
  func.func @transform_3(%arg0: i32) -> (i32, i32) {
    %c0_i32 = arith.constant 0 : i32
    %c0_i32_0 = arith.constant 0 : i32
    return %arg0, %c0_i32 : i32, i32
  }
  func.func @transform_4(%arg0: i32) -> (i32, i32) {
    %c0_i32 = arith.constant 0 : i32
    %c0_i32_0 = arith.constant 0 : i32
    return %arg0, %c0_i32 : i32, i32
  }
  func.func @transform_5(%arg0: i32) -> (i32, i32, i32) {
    %c0_i32 = arith.constant 0 : i32
    %c0_i32_0 = arith.constant 0 : i32
    %c0_i32_1 = arith.constant 0 : i32
    return %c0_i32, %arg0, %c0_i32_0 : i32, i32, i32
  }
}

</mosaic_0001>

<llo_original>
// kernel: drdpo_loss.1
$region0: #{drdpo_loss.1}
  #allocation0 [shape = 'u32[]', space=smem, size = 0x4, offset = 0x4, fixed_abs, tag = 'smem constant byte address 0x4 - core index']
  #allocation1 [shape = 'u32[144,128]{1,0:T(1,128)}', space=vmem, size = 0x12000, scoped, tag = 'internal scratch']
  %s0 = inlined_call_operand.vmem [shape: f32[1,128], index: 0, kind: input, shape index: {}]
  %s1 = inlined_call_operand.vmem [shape: f32[1,128], index: 1, kind: input, shape index: {}]
  %s2 = inlined_call_operand.vmem [shape: f32[1,128], index: 2, kind: input, shape index: {}]
  %s3 = inlined_call_operand.vmem [shape: f32[1,128], index: 3, kind: input, shape index: {}]
  %s4 = inlined_call_operand.vmem [shape: f32[1,2], index: 4, kind: output, shape index: {0}]
  %s5 = inlined_call_operand.vmem [shape: f32[2,1,128], index: 5, kind: output, shape index: {1}]
  %6 = xla_tuple %s4, %s5
  %s7 = sld [smem:[#allocation0]]
  $region34: #{drdpo_loss.1} parent=0
    _
  %s9 = ssub.s32 1, %s7
  %s10 = scalar_select 0, %s9, %s7
  $region1: #{drdpo_loss.1} parent=0
    #allocation2 [shape = 'u8[512]{0}', space=smem, size = 0x200, scoped, tag = 'output window, operand 0, single buffered']
    #allocation3 [shape = 's32[1]{0}', space=sflag, size = 0x4, scoped, tag = 'scoped memory for drdpo_loss.1']
    %11 = vsyncpa [#allocation3], 0
    // Predicated region
    $region2: #{drdpo_loss.1} parent=1 // pred_check
      _
    $region3: #{drdpo_loss.1} parent=1 // pred_check_branch
      %13 = sbr.rel (0) target = $region5
    $region4: #{drdpo_loss.1} parent=1 // pred_region
      _
    $region5: #{drdpo_loss.1} parent=1 // pred_fallthru
      _
    // Predicated region
    $region6: #{drdpo_loss.1} parent=1 // pred_check
      _
    $region7: #{drdpo_loss.1} parent=1 // pred_check_branch
      %15 = sbr.rel (0) target = $region9
    $region8: #{drdpo_loss.1} parent=1 // pred_region
      _
    $region9: #{drdpo_loss.1} parent=1 // pred_fallthru
      _
    // Predicated region
    $region10: #{drdpo_loss.1} parent=1 // pred_check
      _
    $region11: #{drdpo_loss.1} parent=1 // pred_check_branch
      %17 = sbr.rel (0) target = $region13
    $region12: #{drdpo_loss.1} parent=1 // pred_region
      _
    $region13: #{drdpo_loss.1} parent=1 // pred_fallthru
      _
    // Predicated region
    $region14: #{drdpo_loss.1} parent=1 // pred_check
      _
    $region15: #{drdpo_loss.1} parent=1 // pred_check_branch
      %19 = sbr.rel (0) target = $region17
    $region16: #{drdpo_loss.1} parent=1 // pred_region
      _
    $region17: #{drdpo_loss.1} parent=1 // pred_fallthru
      _
    %v20 = vld [vmem:[%s0] sm:$0x1]
    %v21 = vld [vmem:[%s1] sm:$0x1]
    %v22 = vld [vmem:[%s2] sm:$0x1]
    %v23 = vld [vmem:[%s3] sm:$0x1]
    %v24 = vsub.f32 %v20, %v21
    %v25 = vsub.f32 %v22, %v23
    %v26 = vsub.f32 %v24, %v25
    %v27 = vmul.f32 %v26, 0.1
    %v28 = vmin.f32 %v27, 0.0
    %v29 = vand.u32 2147483647, %v27
    %v30 = vsub.f32 0.0, %v29
    %v31 = vmul.f32 %v30, 1.442695
    %v32 = vpow.pop %v31
    %v33 = vadd.f32 %v32, 1.0
    %v34 = vlog2.pop %v33
    %v35 = vmul.f32 %v34, 0.6931472
    %v36 = vmul.f32 -0.5, %v32
    %v37 = vadd.f32 %v36, 1.0
    %v38 = vmul.f32 %v37, %v32
    %v39 = vand.u32 2147483647, %v32
    %vm40 = vcmp.lt.f32.partialorder %v39, 0.0004427343
    %v41 = vsel %vm40, %v38, %v35
    %v42 = vsub.f32 %v28, %v41
    %v43 = vsub.f32 0.0, %v42
    %v44 = vmul.f32 %v27, 0.1
    %v45 = vadd.f32 %v43, %v44
    %v46 = vsub.f32 0.0, %v45
    %v47 = vlaneseq
    %v48 = vshrl.u32 %v47, 7
    %v49 = vlaneseq
    %v50 = vand.u32 %v49, 127
    %v51 = vmul.u32 %v48, 128
    %v52 = vadd.s32 %v51, %v50
    %s53 = smul.u32 0, 128
    %s54 = ssub.s32 8, %s53
    %v55 = vstv %s54
    %vm56 = vcmp.lt.s32.totalorder %v52, %v55
    %v57 = vsel %vm56, %v46, -inf
    %vm58 = vcmask 1040384
    %v59 = vsel %vm58, %v57, -inf
    %60 = vmax.xlane.f32.xlu0 %v59
    %v61 = vpop.xlane.xlu0 %60
    %v62 = vrot.slane %v61, 4
    %v63 = vmax.f32 %v61, %v62
    %v64 = vrot.slane %v63, 2
    %v65 = vmax.f32 %v63, %v64
    %v66 = vrot.slane %v65, 1
    %v67 = vmax.f32 %v65, %v66
    %s68 = vtos %v67
    %s69 = scalar_lea.smem [#allocation2], 0
    %70 = sst [smem:[%s69]] %s68
    %v71 = vstv %s68
    %v72 = vsub.f32 %v57, %v71
    %v73 = vmul.f32 %v72, 1.442695
    %v74 = vpow.pop %v73
    %v75 = vsel %vm58, %v74, 0.0
    %76 = vadd.xlane.f32.xlu0 %v75
    %v77 = vpop.xlane.xlu0 %76
    %v78 = vrot.slane %v77, 4
    %v79 = vadd.f32 %v77, %v78
    %v80 = vrot.slane %v79, 2
    %v81 = vadd.f32 %v79, %v80
    %v82 = vrot.slane %v81, 1
    %v83 = vadd.f32 %v81, %v82
    %s84 = vtos %v83
    %s85 = scalar_lea.smem [#allocation2], 1
    %86 = sst [smem:[%s85]] %s84
    %v87 = vsub.f32 %v20, %v22
    %v88 = vmul.f32 %v87, 0.1
    %89 = vst [vmem:[%s5] sm:$0x1] %v88
    %v90 = vsub.f32 %v21, %v23
    %v91 = vmul.f32 %v90, 0.1
    %s92 = scalar_lea.vmem %s5, 1
    %93 = vst [vmem:[%s92] sm:$0x1] %v91
    // Predicated region
    $region18: #{drdpo_loss.1} parent=1 // pred_check
      _
    $region19: #{drdpo_loss.1} parent=1 // pred_check_branch
      %95 = sbr.rel (0) target = $region21
    $region20: #{drdpo_loss.1} parent=1 // pred_region
      %s97 = ssub.s32 16, 16
      %98 = vsyncadd [#allocation3], %s97
      %s100 = sshll.u32 %s4, 4
      %s101 = int_to_ptr.vmem [resolvable:$true] %s100
      %103 = dma.smem_to_vmem [#allocation2], 16, %s101, [#allocation3]
    $region21: #{drdpo_loss.1} parent=1 // pred_fallthru
      _
    // Predicated region
    $region22: #{drdpo_loss.1} parent=1 // pred_check
      _
    $region23: #{drdpo_loss.1} parent=1 // pred_check_branch
      %105 = sbr.rel (0) target = $region25
    $region24: #{drdpo_loss.1} parent=1 // pred_region
      _
    $region25: #{drdpo_loss.1} parent=1 // pred_fallthru
      _
    // Predicated region
    $region26: #{drdpo_loss.1} parent=1 // pred_check
      _
    $region27: #{drdpo_loss.1} parent=1 // pred_check_branch
      %107 = sbr.rel (0) target = $region29
    $region28: #{drdpo_loss.1} parent=1 // pred_region
      %108 = dma.done [#allocation3], 16
    $region29: #{drdpo_loss.1} parent=1 // pred_fallthru
      _
    // Predicated region
    $region30: #{drdpo_loss.1} parent=1 // pred_check
      _
    $region31: #{drdpo_loss.1} parent=1 // pred_check_branch
      %110 = sbr.rel (0) target = $region33
    $region32: #{drdpo_loss.1} parent=1 // pred_region
      _
    $region33: #{drdpo_loss.1} parent=1 // pred_fallthru
      _
    %111 = sfence
    %112 = vsyncpa [#allocation3], 1

</llo_original>
